<compile_context>
chip_gen: v5e
topology: v5e:2x2
jax: 0.10.0
libtpu: 0.0.40
codegen_flags: <defaults>
</compile_context>

<pallas_src>
import functools

import jax
import jax.numpy as jnp
from jax import lax
from jax.experimental import pallas as pl
from jax.experimental.pallas import tpu as pltpu

_LANE = 128
_SUBLANE = 8
_MAX_T_TILE = 1024
_VMEM_TILE_BUDGET = 40 * 1024 * 1024   # double-buffered working-set cap (v7x-safe)
_VMEM_LIMIT_CAP = 48 * 1024 * 1024     # scoped-VMEM request cap (v7x has 64 MiB phys)


def _tacotron2_loss_kernel(mel_out_ref, mel_post_ref, mel_tgt_ref,
                           gate_out_ref, gate_tgt_ref, out_ref,
                           *, inv_mel_n, inv_gate_n, B, T,
                           b_tile, t_tile, b_ragged, t_ragged):
    """One (B-tile, T-tile) step of the MSE+MSE+BCEWithLogits partial sums."""
    bi = pl.program_id(0)
    ti = pl.program_id(1)

    # Output block depends only on the B-tile index -> VMEM-resident accumulator.
    # At ti == 0 we initialize it AND fold in the gate BCE term; the gate slabs
    # use a ti-constant index_map so they are DMA'd only once per B-tile.
    @pl.when(ti == 0)
    def _init_and_gate():
        x = gate_out_ref[...].astype(jnp.float32)          # logits  (b_tile, T)
        z = gate_tgt_ref[...].astype(jnp.float32)          # targets (b_tile, T)
        # Numerically stable BCEWithLogits: max(x,0) - x*z + log1p(exp(-|x|))
        bce = jnp.maximum(x, 0.0) - x * z + jnp.log1p(jnp.exp(-jnp.abs(x)))
        if b_ragged:  # static: only emitted when B % b_tile != 0
            b_idx = bi * b_tile + lax.broadcasted_iota(jnp.int32, bce.shape, 0)
            bce = jnp.where(b_idx < B, bce, 0.0)
        gate_col = jnp.sum(bce, axis=1, keepdims=True) * inv_gate_n  # (b_tile, 1)
        # Single full-block store: gate sums in lane 0, zeros elsewhere.
        lane = lax.broadcasted_iota(jnp.int32, (b_tile, t_tile), 1)
        out_ref[...] = jnp.where(lane == 0, gate_col, 0.0)

    # ---- mel MSE partial sums: (out - tgt)^2 + (postnet - tgt)^2 ------------
    tgt = mel_tgt_ref[...].astype(jnp.float32)
    d1 = mel_out_ref[...].astype(jnp.float32) - tgt
    d2 = mel_post_ref[...].astype(jnp.float32) - tgt
    sq = d1 * d1 + d2 * d2                                  # (b_tile, n_mel, t_tile)
    mel_partial = jnp.sum(sq, axis=1)                       # (b_tile, t_tile)

    # Mask ragged tails (edge blocks read unspecified data beyond the array).
    if t_ragged:  # static: only emitted when T % t_tile != 0
        t_idx = ti * t_tile + lax.broadcasted_iota(jnp.int32, (b_tile, t_tile), 1)
        mel_partial = jnp.where(t_idx < T, mel_partial, 0.0)
    if b_ragged:  # static: only emitted when B % b_tile != 0
        b_idx = bi * b_tile + lax.broadcasted_iota(jnp.int32, (b_tile, t_tile), 0)
        mel_partial = jnp.where(b_idx < B, mel_partial, 0.0)

    # Scale by 1/N per stream so the wrapper's single jnp.sum yields the means.
    out_ref[...] += mel_partial * inv_mel_n


@jax.jit
def tacotron2_loss(mel_out, mel_out_postnet, gate_out, mel_target, gate_target):
    """Pallas implementation of Tacotron2Loss.forward.

    mel_out, mel_out_postnet, mel_target : (B, n_mel, T)
    gate_out, gate_target                : (B, T) (or anything reshapeable;
                                           the PyTorch .view(-1, 1) is a no-op
                                           for a mean reduction)
    Inputs may be f32 or bf16 (no wrapper upcast -- the kernel casts to f32).
    Returns a scalar float32 loss.
    """
    B, n_mel, T = mel_out.shape
    gate_out = gate_out.reshape(B, -1)
    gate_target = gate_target.reshape(B, -1)
    assert gate_out.shape == (B, T) and gate_target.shape == (B, T)

    # ---- tile sizes (no padding: ragged tails are masked in-kernel) ---------
    b_tile = _SUBLANE if B >= _SUBLANE else B          # full-dim block if B < 8
    if T < _LANE:
        t_tile = T                                     # full-extent (no mask)
    elif T % _LANE == 0:
        t_tile = min(_MAX_T_TILE, T)
    else:
        t_tile = min(_MAX_T_TILE, (T // _LANE) * _LANE)

    mel_itemsize = jnp.dtype(mel_out.dtype).itemsize
    gate_itemsize = jnp.dtype(gate_out.dtype).itemsize

    def _working_set(tt):  # double-buffered VMEM footprint estimate
        mel = 3 * 2 * b_tile * n_mel * tt * mel_itemsize
        gate = 2 * 2 * b_tile * T * gate_itemsize
        out = 2 * b_tile * tt * 4
        return mel + gate + out

    while t_tile > _LANE and _working_set(t_tile) > _VMEM_TILE_BUDGET:
        t_tile -= _LANE

    t_ragged = (T % t_tile) != 0
    b_ragged = (B % b_tile) != 0
    grid = (pl.cdiv(B, b_tile), pl.cdiv(T, t_tile))

    vmem_limit = int(min(_VMEM_LIMIT_CAP,
                         max(32 * 1024 * 1024, _working_set(t_tile) + 8 * 1024 * 1024)))

    mel_spec = pl.BlockSpec((b_tile, n_mel, t_tile), lambda bi, ti: (bi, 0, ti))
    gate_spec = pl.BlockSpec((b_tile, T), lambda bi, ti: (bi, 0))   # ti-constant
    out_spec = pl.BlockSpec((b_tile, t_tile), lambda bi, ti: (bi, 0))

    kernel = functools.partial(
        _tacotron2_loss_kernel,
        inv_mel_n=1.0 / float(B * n_mel * T),
        inv_gate_n=1.0 / float(B * T),
        B=B, T=T, b_tile=b_tile, t_tile=t_tile,
        b_ragged=b_ragged, t_ragged=t_ragged,
    )

    cost = pl.CostEstimate(
        flops=int(7 * B * n_mel * T + 8 * B * T),
        transcendentals=int(2 * B * T),
        bytes_accessed=int(3 * B * n_mel * T * mel_itemsize
                           + 2 * B * T * gate_itemsize
                           + B * t_tile * 4),
    )

    partial_sums = pl.pallas_call(
        kernel,
        out_shape=jax.ShapeDtypeStruct((B, t_tile), jnp.float32),
        grid=grid,
        in_specs=[mel_spec, mel_spec, mel_spec, gate_spec, gate_spec],
        out_specs=out_spec,
        compiler_params=pltpu.CompilerParams(
            dimension_semantics=("parallel", "arbitrary"),
            vmem_limit_bytes=vmem_limit,
        ),
        cost_estimate=cost,
    )(mel_out, mel_out_postnet, mel_target, gate_out, gate_target)

    # Single cross-lane/sublane reduction of the lane-dense partial sums.
    return jnp.sum(partial_sums)


def _reference_loss(mel_out, mel_out_postnet, gate_out, mel_target, gate_target):
    """Plain-JAX reference mirroring the PyTorch module."""
    mel_loss = (jnp.mean((mel_out - mel_target) ** 2)
                + jnp.mean((mel_out_postnet - mel_target) ** 2))
    x = gate_out.reshape(-1, 1).astype(jnp.float32)
    z = gate_target.reshape(-1, 1).astype(jnp.float32)
    bce = jnp.maximum(x, 0.0) - x * z + jnp.log1p(jnp.exp(-jnp.abs(x)))
    return mel_loss + jnp.mean(bce)


if __name__ == "__main__":
    key = jax.random.PRNGKey(0)

    # Case 1: small, full-extent blocks (no masking path).
    # Case 2: ragged B and T tails to exercise the in-kernel masking path.
    for (B, n_mel, T) in [(2, 8, 16), (10, 8, 200)]:
        k1, k2, k3, k4, k5, key = jax.random.split(key, 6)
        mel_out = jax.random.normal(k1, (B, n_mel, T), dtype=jnp.float32)
        mel_out_postnet = jax.random.normal(k2, (B, n_mel, T), dtype=jnp.float32)
        mel_target = jax.random.normal(k3, (B, n_mel, T), dtype=jnp.float32)
        gate_out = jax.random.normal(k4, (B, T), dtype=jnp.float32)       # logits
        gate_target = (jax.random.uniform(k5, (B, T)) > 0.5).astype(jnp.float32)

        loss = jax.block_until_ready(
            tacotron2_loss(mel_out, mel_out_postnet, gate_out,
                           mel_target, gate_target))
        ref = _reference_loss(mel_out, mel_out_postnet, gate_out,
                              mel_target, gate_target)
        assert jnp.allclose(loss, ref, rtol=1e-5, atol=1e-5), (B, n_mel, T, loss, ref)

    print("KERNEL_OK")
</pallas_src>

<mosaic_0001>
module attributes {stable_mosaic.version = 11 : i64} {
  func.func @_tacotron2_loss_kernel(%arg0: i32, %arg1: i32, %arg2: memref<2x8x16xf32, #tpu.memory_space<vmem>>, %arg3: memref<2x8x16xf32, #tpu.memory_space<vmem>>, %arg4: memref<2x8x16xf32, #tpu.memory_space<vmem>>, %arg5: memref<2x16xf32, #tpu.memory_space<vmem>>, %arg6: memref<2x16xf32, #tpu.memory_space<vmem>>, %arg7: memref<2x16xf32, #tpu.memory_space<vmem>>) attributes {dimension_semantics = [#tpu.dimension_semantics<parallel>, #tpu.dimension_semantics<arbitrary>], iteration_bounds = array<i64: 1, 1>, scalar_prefetch = 0 : i64, scratch_operands = 0 : i64, tpu.core_type = #tpu.core_type<tc>, window_params = [{transform_indices = @transform_0, window_bounds = array<i64: 2, 8, 16>}, {transform_indices = @transform_1, window_bounds = array<i64: 2, 8, 16>}, {transform_indices = @transform_2, window_bounds = array<i64: 2, 8, 16>}, {transform_indices = @transform_3, window_bounds = array<i64: 2, 16>}, {transform_indices = @transform_4, window_bounds = array<i64: 2, 16>}, {transform_indices = @transform_5, window_bounds = array<i64: 2, 16>}]} {
    %c0_i32 = arith.constant 0 : i32
    %0 = arith.cmpi eq, %arg1, %c0_i32 : i32
    %1 = arith.extui %0 : i1 to i32
    %c0_i32_0 = arith.constant 0 : i32
    %2 = arith.cmpi ne, %1, %c0_i32_0 : i32
    scf.if %2 {
      %c0_14 = arith.constant 0 : index
      %c0_15 = arith.constant 0 : index
      %17 = vector.load %arg5[%c0_14, %c0_15] : memref<2x16xf32, #tpu.memory_space<vmem>>, vector<2x16xf32>
      %c0_16 = arith.constant 0 : index
      %c0_17 = arith.constant 0 : index
      %18 = vector.load %arg6[%c0_16, %c0_17] : memref<2x16xf32, #tpu.memory_space<vmem>>, vector<2x16xf32>
      %cst_18 = arith.constant 0.000000e+00 : f32
      %19 = vector.broadcast %cst_18 : f32 to vector<2x16xf32>
      %20 = arith.maximumf %17, %19 : vector<2x16xf32>
      %21 = arith.mulf %17, %18 : vector<2x16xf32>
      %22 = arith.subf %20, %21 : vector<2x16xf32>
      %23 = math.absf %17 : vector<2x16xf32>
      %cst_19 = arith.constant 0.000000e+00 : f32
      %24 = vector.broadcast %cst_19 : f32 to vector<2x16xf32>
      %25 = arith.subf %24, %23 : vector<2x16xf32>
      %26 = math.exp %25 : vector<2x16xf32>
      %27 = math.log1p %26 : vector<2x16xf32>
      %28 = arith.addf %22, %27 : vector<2x16xf32>
      %cst_20 = arith.constant dense<0.000000e+00> : vector<2xf32>
      %29 = vector.multi_reduction <add>, %28, %cst_20 [1] : vector<2x16xf32> to vector<2xf32>
      %30 = vector.shape_cast %29 : vector<2xf32> to vector<2x1xf32>
      %cst_21 = arith.constant 3.125000e-02 : f32
      %31 = vector.broadcast %cst_21 : f32 to vector<2x1xf32>
      %32 = arith.mulf %30, %31 : vector<2x1xf32>
      %33 = tpu.iota {dimensions = array<i32: 1>} : vector<2x16xi32>
      %c0_i32_22 = arith.constant 0 : i32
      %34 = vector.broadcast %c0_i32_22 : i32 to vector<2x16xi32>
      %35 = arith.cmpi eq, %33, %34 : vector<2x16xi32>
      %cst_23 = arith.constant 0.000000e+00 : f32
      %36 = vector.shape_cast %32 : vector<2x1xf32> to vector<2x1xf32>
      %37 = vector.broadcast %36 : vector<2x1xf32> to vector<2x16xf32>
      %38 = vector.broadcast %cst_23 : f32 to vector<2x16xf32>
      %39 = arith.select %35, %37, %38 : vector<2x16xi1>, vector<2x16xf32>
      %c0_24 = arith.constant 0 : index
      %c0_25 = arith.constant 0 : index
      %40 = vector.load %arg7[%c0_24, %c0_25] : memref<2x16xf32, #tpu.memory_space<vmem>>, vector<2x16xf32>
      tpu.vector_store %arg7[%c0_24, %c0_25], %39 {strides = array<i32>} : memref<2x16xf32, #tpu.memory_space<vmem>>, vector<2x16xf32>,
    } else {
    }
    %c0 = arith.constant 0 : index
    %c0_1 = arith.constant 0 : index
    %c0_2 = arith.constant 0 : index
    %3 = vector.load %arg4[%c0, %c0_1, %c0_2] : memref<2x8x16xf32, #tpu.memory_space<vmem>>, vector<2x8x16xf32>
    %c0_3 = arith.constant 0 : index
    %c0_4 = arith.constant 0 : index
    %c0_5 = arith.constant 0 : index
    %4 = vector.load %arg2[%c0_3, %c0_4, %c0_5] : memref<2x8x16xf32, #tpu.memory_space<vmem>>, vector<2x8x16xf32>
    %5 = arith.subf %4, %3 : vector<2x8x16xf32>
    %c0_6 = arith.constant 0 : index
    %c0_7 = arith.constant 0 : index
    %c0_8 = arith.constant 0 : index
    %6 = vector.load %arg3[%c0_6, %c0_7, %c0_8] : memref<2x8x16xf32, #tpu.memory_space<vmem>>, vector<2x8x16xf32>
    %7 = arith.subf %6, %3 : vector<2x8x16xf32>
    %8 = arith.mulf %5, %5 : vector<2x8x16xf32>
    %9 = arith.mulf %7, %7 : vector<2x8x16xf32>
    %10 = arith.addf %8, %9 : vector<2x8x16xf32>
    %cst = arith.constant dense<0.000000e+00> : vector<2x16xf32>
    %11 = vector.multi_reduction <add>, %10, %cst [1] : vector<2x8x16xf32> to vector<2x16xf32>
    %c0_9 = arith.constant 0 : index
    %c0_10 = arith.constant 0 : index
    %12 = vector.load %arg7[%c0_9, %c0_10] : memref<2x16xf32, #tpu.memory_space<vmem>>, vector<2x16xf32>
    %cst_11 = arith.constant 3.906250e-03 : f32
    %13 = vector.broadcast %cst_11 : f32 to vector<2x16xf32>
    %14 = arith.mulf %11, %13 : vector<2x16xf32>
    %15 = arith.addf %12, %14 : vector<2x16xf32>
    %c0_12 = arith.constant 0 : index
    %c0_13 = arith.constant 0 : index
    %16 = vector.load %arg7[%c0_12, %c0_13] : memref<2x16xf32, #tpu.memory_space<vmem>>, vector<2x16xf32>
    tpu.vector_store %arg7[%c0_12, %c0_13], %15 {strides = array<i32>} : memref<2x16xf32, #tpu.memory_space<vmem>>, vector<2x16xf32>,
    return
  }
  func.func @transform_0(%arg0: i32, %arg1: i32) -> (i32, i32, i32) {
    %c0_i32 = arith.constant 0 : i32
    %c0_i32_0 = arith.constant 0 : i32
    return %arg0, %c0_i32, %arg1 : i32, i32, i32
  }
  func.func @transform_1(%arg0: i32, %arg1: i32) -> (i32, i32, i32) {
    %c0_i32 = arith.constant 0 : i32
    %c0_i32_0 = arith.constant 0 : i32
    return %arg0, %c0_i32, %arg1 : i32, i32, i32
  }
  func.func @transform_2(%arg0: i32, %arg1: i32) -> (i32, i32, i32) {
    %c0_i32 = arith.constant 0 : i32
    %c0_i32_0 = arith.constant 0 : i32
    return %arg0, %c0_i32, %arg1 : i32, i32, i32
  }
  func.func @transform_3(%arg0: i32, %arg1: i32) -> (i32, i32) {
    %c0_i32 = arith.constant 0 : i32
    %c0_i32_0 = arith.constant 0 : i32
    return %arg0, %c0_i32 : i32, i32
  }
  func.func @transform_4(%arg0: i32, %arg1: i32) -> (i32, i32) {
    %c0_i32 = arith.constant 0 : i32
    %c0_i32_0 = arith.constant 0 : i32
    return %arg0, %c0_i32 : i32, i32
  }
  func.func @transform_5(%arg0: i32, %arg1: i32) -> (i32, i32) {
    %c0_i32 = arith.constant 0 : i32
    %c0_i32_0 = arith.constant 0 : i32
    return %arg0, %c0_i32 : i32, i32
  }
}

</mosaic_0001>

<llo_original>
// kernel: tacotron2_loss.1
$region0: #{tacotron2_loss.1}
  #allocation0 [shape = 'u32[]', space=smem, size = 0x4, offset = 0x4, fixed_abs, tag = 'smem constant byte address 0x4 - core index']
  #allocation1 [shape = 'u32[72,128]{1,0:T(1,128)}', space=vmem, size = 0x9000, scoped, tag = 'internal scratch']
  %s0 = inlined_call_operand.hbm [shape: f32[2,8,16], index: 0, kind: input, shape index: {}]
  %s1 = inlined_call_operand.hbm [shape: f32[2,8,16], index: 1, kind: input, shape index: {}]
  %s2 = inlined_call_operand.hbm [shape: f32[2,8,16], index: 2, kind: input, shape index: {}]
  %s3 = inlined_call_operand.hbm [shape: f32[2,16], index: 3, kind: input, shape index: {}]
  %s4 = inlined_call_operand.vmem [shape: f32[2,16], index: 4, kind: input, shape index: {}]
  %s5 = inlined_call_operand.vmem [shape: f32[2,16], index: 5, kind: output, shape index: {}]
  %s6 = sld [smem:[#allocation0]]
  $region50: #{tacotron2_loss.1} parent=0
    _
  %s8 = ssub.s32 1, %s6
  %s9 = scalar_select 0, %s8, %s6
  $region1: #{tacotron2_loss.1} parent=0
    #allocation2 [shape = 'u8[8192]{0}', space=vmem, size = 0x2000, scoped, tag = 'input window, operand 0, single buffered']
    #allocation3 [shape = 's32[1]{0}', space=sflag, size = 0x4, scoped, tag = 'scoped memory for tacotron2_loss.1']
    #allocation4 [shape = 'u8[8192]{0}', space=vmem, size = 0x2000, scoped, tag = 'input window, operand 1, single buffered']
    #allocation5 [shape = 's32[1]{0}', space=sflag, size = 0x4, scoped, tag = 'scoped memory for tacotron2_loss.1']
    #allocation6 [shape = 'u8[8192]{0}', space=vmem, size = 0x2000, scoped, tag = 'input window, operand 2, single buffered']
    #allocation7 [shape = 'u8[1024]{0}', space=vmem, size = 0x400, scoped, tag = 'input window, operand 3, single buffered']
    #allocation8 [shape = 's32[1]{0}', space=sflag, size = 0x4, scoped, tag = 'scoped memory for tacotron2_loss.1']
    %10 = vsyncpa [#allocation3], 0
    %11 = vsyncpa [#allocation5], 0
    %12 = vsyncpa [#allocation8], 0
    // Predicated region
    $region2: #{tacotron2_loss.1} parent=1 // pred_check
      _
    $region3: #{tacotron2_loss.1} parent=1 // pred_check_branch
      %14 = sbr.rel (0) target = $region5
    $region4: #{tacotron2_loss.1} parent=1 // pred_region
      %16 = vsyncadd [#allocation3], 0
      %s17 = sshll.u32 %s0, 4
      %s18 = int_to_ptr.hbm [resolvable:$true] %s17
      %s19 = sshll.u32 [#allocation2], 4
      %s20 = int_to_ptr.vmem [resolvable:$true] %s19
      %25 = dma.hbm_to_vmem [thread:$0]  %s18, 256, %s20, [#allocation3], 128, 128, 8
    $region5: #{tacotron2_loss.1} parent=1 // pred_fallthru
      _
    // Predicated region
    $region6: #{tacotron2_loss.1} parent=1 // pred_check
      _
    $region7: #{tacotron2_loss.1} parent=1 // pred_check_branch
      %27 = sbr.rel (0) target = $region9
    $region8: #{tacotron2_loss.1} parent=1 // pred_region
      %29 = vsyncadd [#allocation5], 0
      %s30 = sshll.u32 %s1, 4
      %s31 = int_to_ptr.hbm [resolvable:$true] %s30
      %s32 = sshll.u32 [#allocation4], 4
      %s33 = int_to_ptr.vmem [resolvable:$true] %s32
      %38 = dma.hbm_to_vmem [thread:$0]  %s31, 256, %s33, [#allocation5], 128, 128, 8
    $region9: #{tacotron2_loss.1} parent=1 // pred_fallthru
      _
    // Predicated region
    $region10: #{tacotron2_loss.1} parent=1 // pred_check
      _
    $region11: #{tacotron2_loss.1} parent=1 // pred_check_branch
      %40 = sbr.rel (0) target = $region13
    $region12: #{tacotron2_loss.1} parent=1 // pred_region
      %42 = vsyncadd [#allocation5], 0
      %s43 = sshll.u32 %s2, 4
      %s44 = int_to_ptr.hbm [resolvable:$true] %s43
      %s45 = sshll.u32 [#allocation6], 4
      %s46 = int_to_ptr.vmem [resolvable:$true] %s45
      %51 = dma.hbm_to_vmem [thread:$0]  %s44, 256, %s46, [#allocation5], 128, 128, 8
    $region13: #{tacotron2_loss.1} parent=1 // pred_fallthru
      _
    // Predicated region
    $region14: #{tacotron2_loss.1} parent=1 // pred_check
      _
    $region15: #{tacotron2_loss.1} parent=1 // pred_check_branch
      %53 = sbr.rel (0) target = $region17
    $region16: #{tacotron2_loss.1} parent=1 // pred_region
      %55 = vsyncadd [#allocation8], 0
      %s57 = sshll.u32 %s3, 4
      %s58 = int_to_ptr.hbm [resolvable:$true] %s57
      %s59 = sshll.u32 [#allocation7], 4
      %s60 = int_to_ptr.vmem [resolvable:$true] %s59
      %62 = dma.hbm_to_vmem [thread:$0]  %s58, 32, %s60, [#allocation8]
    $region17: #{tacotron2_loss.1} parent=1 // pred_fallthru
      _
    // Predicated region
    $region18: #{tacotron2_loss.1} parent=1 // pred_check
      _
    $region19: #{tacotron2_loss.1} parent=1 // pred_check_branch
      %64 = sbr.rel (0) target = $region21
    $region20: #{tacotron2_loss.1} parent=1 // pred_region
      _
    $region21: #{tacotron2_loss.1} parent=1 // pred_fallthru
      _
    // Predicated region
    $region22: #{tacotron2_loss.1} parent=1 // pred_check
      _
    $region23: #{tacotron2_loss.1} parent=1 // pred_check_branch
      %66 = sbr.rel (0) target = $region25
    $region24: #{tacotron2_loss.1} parent=1 // pred_region
      %68 = dma.done [#allocation3], 256
    $region25: #{tacotron2_loss.1} parent=1 // pred_fallthru
      _
    // Predicated region
    $region26: #{tacotron2_loss.1} parent=1 // pred_check
      _
    $region27: #{tacotron2_loss.1} parent=1 // pred_check_branch
      %70 = sbr.rel (0) target = $region29
    $region28: #{tacotron2_loss.1} parent=1 // pred_region
      %72 = dma.done [#allocation5], 256
    $region29: #{tacotron2_loss.1} parent=1 // pred_fallthru
      _
    // Predicated region
    $region30: #{tacotron2_loss.1} parent=1 // pred_check
      _
    $region31: #{tacotron2_loss.1} parent=1 // pred_check_branch
      %74 = sbr.rel (0) target = $region33
    $region32: #{tacotron2_loss.1} parent=1 // pred_region
      %76 = dma.done [#allocation5], 256
    $region33: #{tacotron2_loss.1} parent=1 // pred_fallthru
      _
    // Predicated region
    $region34: #{tacotron2_loss.1} parent=1 // pred_check
      _
    $region35: #{tacotron2_loss.1} parent=1 // pred_check_branch
      %78 = sbr.rel (0) target = $region37
    $region36: #{tacotron2_loss.1} parent=1 // pred_region
      %80 = dma.done [#allocation8], 32
    $region37: #{tacotron2_loss.1} parent=1 // pred_fallthru
      _
    %p81 = scmp.eq.s32.totalorder 0, 0
    // Predicated region
    $region38: #{tacotron2_loss.1} parent=1 // pred_check
      %p82 = pneg %p81
    $region39: #{tacotron2_loss.1} parent=1 // pred_check_branch
      %84 = sbr.rel (%p82) target = $region41
    $region40: #{tacotron2_loss.1} parent=1 // pred_region
      %v85 = vld [vmem:[#allocation7] sm:$0x3]
      %v86 = vld [vmem:[%s4] sm:$0x3]
      %v87 = vmax.f32 %v85, 0.0
      %v88 = vmul.f32 %v85, %v86
      %v89 = vsub.f32 %v87, %v88
      %v90 = vand.u32 2147483647, %v85
      %v91 = vsub.f32 0.0, %v90
      %v92 = vmul.f32 %v91, 1.442695
      %v93 = vpow.pop %v92
      %v94 = vadd.f32 %v93, 1.0
      %v95 = vlog2.pop %v94
      %v96 = vmul.f32 %v95, 0.6931472
      %v97 = vmul.f32 -0.5, %v93
      %v98 = vadd.f32 %v97, 1.0
      %v99 = vmul.f32 %v98, %v93
      %v100 = vand.u32 2147483647, %v93
      %vm101 = vcmp.lt.f32.partialorder %v100, 0.0004427343
      %v102 = vsel %vm101, %v99, %v96
      %v103 = vadd.f32 %v89, %v102
      %vm104 = vcmask 123904
      %v105 = vsel %vm104, %v103, 0.0
      %106 = vadd.xlane.f32.xlu0 %v105
      %v107 = vpop.xlane.xlu0 %106
      %v108 = vmul.f32 %v107, 0.03125
      %v109 = vlaneseq
      %v110 = vand.u32 %v109, 127
      %vm111 = vcmp.eq.s32.totalorder %v110, 0
      %v112 = vsel %vm111, %v108, 0.0
      %113 = vst.msk [vmem:[%s5] sm:$0x3] %vm104, %v112
    $region41: #{tacotron2_loss.1} parent=1 // pred_fallthru
      _
    %v114 = vld [vmem:[#allocation6] sm:$0xff]
    %v115 = vld [vmem:[#allocation6 + $0x8] sm:$0xff]
    %v116 = vld [vmem:[#allocation2] sm:$0xff]
    %v117 = vld [vmem:[#allocation2 + $0x8] sm:$0xff]
    %v118 = vsub.f32 %v116, %v114
    %v119 = vsub.f32 %v117, %v115
    %v120 = vld [vmem:[#allocation4] sm:$0xff]
    %v121 = vld [vmem:[#allocation4 + $0x8] sm:$0xff]
    %v122 = vsub.f32 %v120, %v114
    %v123 = vsub.f32 %v121, %v115
    %v124 = vmul.f32 %v118, %v118
    %v125 = vmul.f32 %v119, %v119
    %v126 = vmul.f32 %v122, %v122
    %v127 = vmul.f32 %v123, %v123
    %v128 = vadd.f32 %v124, %v126
    %v129 = vadd.f32 %v125, %v127
    %vm130 = vcmask 130048
    %v131 = vsel %vm130, %v128, 0.0
    %v132 = vrot.slane %v131, 4
    %v133 = vadd.f32 %v131, %v132
    %v134 = vrot.slane %v133, 2
    %v135 = vadd.f32 %v133, %v134
    %v136 = vrot.slane %v135, 1
    %v137 = vadd.f32 %v135, %v136
    %v138 = vsel %vm130, %v129, 0.0
    %v139 = vrot.slane %v138, 4
    %v140 = vadd.f32 %v138, %v139
    %v141 = vrot.slane %v140, 2
    %v142 = vadd.f32 %v140, %v141
    %v143 = vrot.slane %v142, 1
    %v144 = vadd.f32 %v142, %v143
    %v145 = vld [vmem:[%s5] sm:$0x3]
    %v146 = vmul.f32 %v137, 0.00390625
    %v147 = vmul.f32 %v144, 0.00390625
    %vm150 = vcmask 1041409
    %v151 = vsel %vm150, %v147, %v146
    %v153 = vadd.f32 %v145, %v151
    %vm154 = vcmask 123904
    %155 = vst.msk [vmem:[%s5] sm:$0x3] %vm154, %v153
    // Predicated region
    $region42: #{tacotron2_loss.1} parent=1 // pred_check
      _
    $region43: #{tacotron2_loss.1} parent=1 // pred_check_branch
      %157 = sbr.rel (0) target = $region45
    $region44: #{tacotron2_loss.1} parent=1 // pred_region
      _
    $region45: #{tacotron2_loss.1} parent=1 // pred_fallthru
      _
    // Predicated region
    $region46: #{tacotron2_loss.1} parent=1 // pred_check
      _
    $region47: #{tacotron2_loss.1} parent=1 // pred_check_branch
      %159 = sbr.rel (0) target = $region49
    $region48: #{tacotron2_loss.1} parent=1 // pred_region
      _
    $region49: #{tacotron2_loss.1} parent=1 // pred_fallthru
      _
    %160 = vsyncpa [#allocation3], 1
    %161 = vsyncpa [#allocation5], 1
    %162 = vsyncpa [#allocation8], 1

</llo_original>
